<compile_context>
chip_gen: v6e
topology: v6e:2x2x1
jax: 0.10.0
libtpu: 0.0.40
codegen_flags: <defaults>
</compile_context>

<pallas_src>
import functools

import jax
import jax.numpy as jnp
import numpy as np
from jax.experimental import pallas as pl
from jax.experimental.pallas import tpu as pltpu

# constants.* equivalents
ALIGN_AVG = "avg"
ALIGN_AVG_HALF_LEFT = "avg_half_left"
ALIGN_AVG_HALF_RIGHT = "avg_half_right"
ALIGN_AVG_FIXED_Q = "avg_fixed_q"
ALIGN_RANDOM_AVG = "random_avg"
ALIGNMENTS = (
    ALIGN_AVG,
    ALIGN_AVG_HALF_LEFT,
    ALIGN_AVG_HALF_RIGHT,
    ALIGN_AVG_FIXED_Q,
    ALIGN_RANDOM_AVG,
)

_LANE = 128


def _cdiv(a, b):
    return -(-a // b)


def _round_up(a, m):
    return _cdiv(a, m) * m


def _weighted_channel_sum_kernel(w_ref, x_ref, o_ref):
    """o[b, s] = sum_c w[b, c, 0] * x[b, c, s]  (f32 accumulate, VPU only).

    Channels are consumed in sublane-sized chunks accumulated into a single
    (TB, TN) f32 carry, so the live intermediate never grows with C (a fused
    x * w[:, :, None] product over the whole tile would spill past the
    64-vreg register file for large C * TN).
    """
    tb, c, tn = x_ref.shape
    chunk = min(8, c)                    # one sublane tile of channels per step
    n_full = c // chunk
    rem = c - n_full * chunk

    def partial_sum(start, size):
        xk = x_ref[:, pl.ds(start, size), :].astype(jnp.float32)   # (tb, size, tn)
        wk = w_ref[:, pl.ds(start, size), :]                        # (tb, size, 1) f32
        return jnp.sum(xk * wk, axis=1)                             # (tb, tn)

    def body(k, acc):
        return acc + partial_sum(pl.multiple_of(k * chunk, chunk), chunk)

    acc = jax.lax.fori_loop(0, n_full, body,
                            jnp.zeros((tb, tn), jnp.float32),
                            unroll=(n_full <= 8))
    if rem:                               # static tail when C % 8 != 0
        acc = acc + partial_sum(n_full * chunk, rem)
    o_ref[...] = acc.astype(o_ref.dtype)


def _channel_weights(x_shape, attention_type, p, q, key, dtype=jnp.float32):
    """Per-(batch, channel) weights reproducing BuildAttention.forward."""
    b, c, _, _ = x_shape
    if attention_type == ALIGN_AVG:
        wvec = jnp.full((c,), 1.0 / c, dtype)
        return jnp.broadcast_to(wvec, (b, c))
    if attention_type == ALIGN_AVG_HALF_LEFT:
        n = max(int(c / 2), 1)
        wvec = jnp.where(jnp.arange(c) < n, 1.0 / n, 0.0).astype(dtype)
        return jnp.broadcast_to(wvec, (b, c))
    if attention_type == ALIGN_AVG_HALF_RIGHT:
        n = max(int(c / 2), 1)
        m = c - n
        assert m >= 1, "ALIGN_AVG_HALF_RIGHT needs at least 2 channels"
        wvec = jnp.where(jnp.arange(c) >= n, 1.0 / m, 0.0).astype(dtype)
        return jnp.broadcast_to(wvec, (b, c))
    if attention_type == ALIGN_AVG_FIXED_Q:
        n = max(int(c * q), 1)
        wvec = jnp.where(jnp.arange(c) < n, 1.0 / n, 0.0).astype(dtype)
        return jnp.broadcast_to(wvec, (b, c))
    if attention_type == ALIGN_RANDOM_AVG:
        if key is None:
            raise ValueError("ALIGN_RANDOM_AVG requires an explicit PRNG key")
        # TODO(synk): torch.distributions.Bernoulli RNG stream is replaced by
        # jax.random.bernoulli (same distribution, different random stream).
        select = jax.random.bernoulli(key, p, (b, c, 1, 1)).astype(dtype)
        select = select.reshape(b, c)
        deno = jnp.sum(select, axis=1, keepdims=True)
        deno = jnp.where(deno == 0.0, 1.0, deno)
        return select / deno
    raise NotImplementedError(attention_type)


def _vmem_params():
    """(physical VMEM bytes, scoped vmem limit, per-x-tile byte budget)."""
    physical = 64 << 20                           # conservative default (v7x per-TC)
    try:
        physical = int(getattr(pltpu.get_tpu_info(), "vmem_capacity_bytes", physical))
    except Exception:
        pass
    # 128-MiB chips (v5e/v6e) -> 64 MiB scoped limit; v7x (64 MiB) -> 48 MiB.
    vmem_limit = min(64 << 20, (physical * 3) // 4)
    # The x tile is double-buffered and expanded to f32 chunk-by-chunk in the
    # kernel; /8 leaves room for that plus weight/output buffers.
    budget = vmem_limit // 8                      # 8 MiB v5e/v6e, 6 MiB v7x
    return physical, vmem_limit, budget


def _choose_tiles(b, c, hw, itemsize, budget):
    """Pick (TB, TN): batch rows and flattened-spatial lanes per block."""
    # Output block is (TB, TN): its 2nd-minor dim must be a multiple of 8 or
    # the full batch, so TB is 8 (with a cdiv/masked-tail grid) or B when B < 8.
    tb = 8 if b >= 8 else b
    hw_up = _round_up(hw, _LANE)

    def x_bytes(tn):
        return tb * c * tn * itemsize

    if x_bytes(hw) <= budget:
        tn = hw                                    # whole spatial extent per block
    else:
        # Largest multiple-of-128 lane extent under the budget ...
        fit = max(_LANE, (budget // (tb * c * itemsize)) // _LANE * _LANE)
        # ... but keep every contiguous DMA segment >= ~2 KiB (512 lanes f32,
        # 1024 lanes bf16) unless that alone would blow the budget.
        seg_tn = min(hw_up, _round_up(_cdiv(2048, itemsize), _LANE))
        tn = max(fit, seg_tn) if x_bytes(seg_tn) <= budget else fit
        tn = min(tn, hw_up)

    # Mid-size inputs: keep >= 4 grid steps so dual-TensorCore chips (v7x) can
    # shard the two "parallel" axes; tiny inputs stay at one step (per-step
    # overhead ~0.35 us would dominate).
    total = b * c * hw * itemsize
    n_b = _cdiv(b, tb)
    if total >= (4 << 20) and n_b * _cdiv(hw, tn) < 4:
        splits = _cdiv(4, n_b)
        tn = min(tn, max(_LANE, _round_up(_cdiv(hw, splits), _LANE)))
    return tb, tn


@functools.partial(jax.jit, static_argnames=("attention_type", "p", "q"))
def build_attention(x, attention_type=ALIGN_AVG, p=1.0, q=1.0, key=None):
    assert x.ndim == 4, x.ndim
    assert attention_type in ALIGNMENTS, attention_type
    assert 0.0 < p <= 1.0, p
    assert 0.0 < q <= 1.0, q
    b, c, h, w = x.shape
    hw = h * w

    wts = _channel_weights(x.shape, attention_type, p, q, key)        # (B, C) f32
    # C on the sublane axis, singleton lane: in-kernel broadcast over TN is a
    # cheap VPU lane splat (no lane->sublane XLU relayout each grid step).
    w3 = wts.reshape(b, c, 1)
    x3 = x.reshape(b, c, hw)          # metadata-only reshape; NO padding copy

    physical, vmem_limit, budget = _vmem_params()
    tb, tn = _choose_tiles(b, c, hw, x.dtype.itemsize, budget)

    # Extreme channel counts: even the minimum (tb, C, 128) tile may exceed the
    # default budget; raise the scoped limit (bounded by physical VMEM).
    # TODO(synk): split C into an "arbitrary" reduction grid axis if (8, C, 128)
    # cannot fit VMEM at all.
    x_tile = tb * c * tn * x.dtype.itemsize
    vmem_limit = max(vmem_limit, min(physical - (8 << 20), 4 * x_tile + (4 << 20)))

    out = pl.pallas_call(
        _weighted_channel_sum_kernel,
        out_shape=jax.ShapeDtypeStruct((b, hw), x.dtype),
        grid_spec=pltpu.PrefetchScalarGridSpec(
            num_scalar_prefetch=0,
            # cdiv grid: ragged final blocks (B % TB, HW % TN) are masked by
            # Pallas — garbage reads only feed output rows/lanes that are
            # dropped on store, so no wrapper-side padding is needed.
            grid=(pl.cdiv(b, tb), pl.cdiv(hw, tn)),
            in_specs=[
                pl.BlockSpec((tb, c, 1), lambda i, j: (i, 0, 0)),
                # TODO(synk): add pipeline_mode=pl.Buffered(3) here if xprof
                # shows exposed DMA on v5e/v7x (re-check the VMEM sum first).
                pl.BlockSpec((tb, c, tn), lambda i, j: (i, 0, j)),
            ],
            out_specs=pl.BlockSpec((tb, tn), lambda i, j: (i, j)),
        ),
        compiler_params=pltpu.CompilerParams(
            # Both axes are independent (no cross-step accumulation) -> lets
            # Mosaic shard grid steps across both TensorCores on v7x.
            dimension_semantics=("parallel", "parallel"),
            vmem_limit_bytes=int(vmem_limit),
        ),
    )(w3, x3)

    return out.reshape(b, 1, h, w)


def build_attention_ref(x, attention_type, p, q, key=None):
    """Pure-JAX reference mirroring the PyTorch module."""
    b, c, h, w = x.shape
    n = max(int(c / 2), 1)
    if attention_type == ALIGN_AVG_HALF_LEFT:
        return x[:, :n, :, :].mean(axis=1, keepdims=True)
    if attention_type == ALIGN_AVG_HALF_RIGHT:
        return x[:, n:, :, :].mean(axis=1, keepdims=True)
    if attention_type == ALIGN_AVG_FIXED_Q:
        n = max(int(c * q), 1)
        return x[:, :n, :, :].mean(axis=1, keepdims=True)
    if attention_type == ALIGN_AVG:
        return x.mean(axis=1, keepdims=True)
    if attention_type == ALIGN_RANDOM_AVG:
        select = jax.random.bernoulli(key, p, (b, c, 1, 1)).astype(x.dtype)
        attention = x * select
        deno = select.sum(axis=(1, 2, 3))
        deno = jnp.where(deno == 0.0, 1.0, deno)
        attention = attention.sum(axis=1, keepdims=True)
        return attention / deno[:, None, None, None]
    raise NotImplementedError(attention_type)


if __name__ == "__main__":
    key = jax.random.PRNGKey(0)
    kx, kb, kx2 = jax.random.split(key, 3)

    # Small shapes consistent with the module's 4-D (B, C, H, W) contract.
    x = jax.random.uniform(kx, (2, 4, 16, 16), dtype=jnp.float32)
    configs = [
        (ALIGN_AVG, 1.0, 1.0),
        (ALIGN_AVG_HALF_LEFT, 1.0, 1.0),
        (ALIGN_AVG_HALF_RIGHT, 1.0, 1.0),
        (ALIGN_AVG_FIXED_Q, 1.0, 0.25),
        (ALIGN_RANDOM_AVG, 0.5, 1.0),
    ]
    for attn_type, p, q in configs:
        got = jax.block_until_ready(
            build_attention(x, attention_type=attn_type, p=p, q=q, key=kb)
        )
        want = build_attention_ref(x, attn_type, p, q, key=kb)
        assert got.shape == (2, 1, 16, 16), got.shape
        np.testing.assert_allclose(
            np.asarray(got), np.asarray(want), rtol=1e-5, atol=1e-6
        )

    # Ragged spatial (H*W % 128 != 0) and ragged batch (B % 8 != 0, B > 8):
    # exercises the pad-free cdiv grid with masked boundary blocks.
    x2 = jax.random.uniform(kx2, (10, 12, 10, 10), dtype=jnp.float32)
    for attn_type in (ALIGN_AVG, ALIGN_AVG_HALF_RIGHT):
        got = jax.block_until_ready(build_attention(x2, attention_type=attn_type))
        want = build_attention_ref(x2, attn_type, 1.0, 1.0)
        assert got.shape == (10, 1, 10, 10), got.shape
        np.testing.assert_allclose(
            np.asarray(got), np.asarray(want), rtol=1e-5, atol=1e-6
        )

    # bf16 smoke test (kernel keeps HBM dtype, accumulates in f32).
    xb = x.astype(jnp.bfloat16)
    got = jax.block_until_ready(build_attention(xb, attention_type=ALIGN_AVG))
    want = build_attention_ref(x, ALIGN_AVG, 1.0, 1.0)
    np.testing.assert_allclose(
        np.asarray(got).astype(np.float32), np.asarray(want), rtol=2e-2, atol=2e-2
    )

    print("KERNEL_OK")
</pallas_src>

<mosaic_0001>
module attributes {stable_mosaic.version = 11 : i64} {
  func.func @_weighted_channel_sum_kernel(%arg0: i32, %arg1: i32, %arg2: memref<2x4x1xf32, #tpu.memory_space<vmem>>, %arg3: memref<2x4x256xf32, #tpu.memory_space<vmem>>, %arg4: memref<2x256xf32, #tpu.memory_space<vmem>>) attributes {dimension_semantics = [#tpu.dimension_semantics<parallel>, #tpu.dimension_semantics<parallel>], iteration_bounds = array<i64: 1, 1>, scalar_prefetch = 0 : i64, scratch_operands = 0 : i64, tpu.core_type = #tpu.core_type<tc>, window_params = [{transform_indices = @transform_0, window_bounds = array<i64: 2, 4, 1>}, {transform_indices = @transform_1, window_bounds = array<i64: 2, 4, 256>}, {transform_indices = @transform_2, window_bounds = array<i64: 2, 256>}]} {
    %cst = arith.constant 0.000000e+00 : f32
    %0 = vector.broadcast %cst : f32 to vector<2x256xf32>
    %c0_i32 = arith.constant 0 : i32
    %c4_i32 = arith.constant 4 : i32
    %1 = arith.muli %c0_i32, %c4_i32 : i32
    %2 = tpu.assume_multiple %1, 4 : i32
    %c0 = arith.constant 0 : index
    %3 = arith.index_cast %2 : i32 to index
    %c0_0 = arith.constant 0 : index
    %4 = vector.load %arg3[%c0, %3, %c0_0] : memref<2x4x256xf32, #tpu.memory_space<vmem>>, vector<2x4x256xf32>
    %c0_1 = arith.constant 0 : index
    %5 = arith.index_cast %2 : i32 to index
    %c0_2 = arith.constant 0 : index
    %6 = vector.load %arg2[%c0_1, %5, %c0_2] : memref<2x4x1xf32, #tpu.memory_space<vmem>>, vector<2x4x1xf32>
    %7 = vector.broadcast %6 : vector<2x4x1xf32> to vector<2x4x256xf32>
    %8 = arith.mulf %4, %7 : vector<2x4x256xf32>
    %cst_3 = arith.constant dense<0.000000e+00> : vector<2x256xf32>
    %9 = vector.multi_reduction <add>, %8, %cst_3 [1] : vector<2x4x256xf32> to vector<2x256xf32>
    %10 = arith.addf %0, %9 : vector<2x256xf32>
    %c1_i32 = arith.constant 1 : i32
    %c0_4 = arith.constant 0 : index
    %c0_5 = arith.constant 0 : index
    %11 = vector.load %arg4[%c0_4, %c0_5] : memref<2x256xf32, #tpu.memory_space<vmem>>, vector<2x256xf32>
    tpu.vector_store %arg4[%c0_4, %c0_5], %10 {strides = array<i32>} : memref<2x256xf32, #tpu.memory_space<vmem>>, vector<2x256xf32>,
    return
  }
  func.func @transform_0(%arg0: i32, %arg1: i32) -> (i32, i32, i32) {
    %c0_i32 = arith.constant 0 : i32
    %c0_i32_0 = arith.constant 0 : i32
    %c0_i32_1 = arith.constant 0 : i32
    return %arg0, %c0_i32, %c0_i32_0 : i32, i32, i32
  }
  func.func @transform_1(%arg0: i32, %arg1: i32) -> (i32, i32, i32) {
    %c0_i32 = arith.constant 0 : i32
    %c0_i32_0 = arith.constant 0 : i32
    return %arg0, %c0_i32, %arg1 : i32, i32, i32
  }
  func.func @transform_2(%arg0: i32, %arg1: i32) -> (i32, i32) {
    %c0_i32 = arith.constant 0 : i32
    return %arg0, %arg1 : i32, i32
  }
}

</mosaic_0001>

<llo_original>
// kernel: build_attention.1
$region0: #{build_attention.1}
  #allocation0 [shape = 'u32[]', space=smem, size = 0x4, offset = 0x4, fixed_abs, tag = 'smem constant byte address 0x4 - core index']
  #allocation1 [shape = 'u32[144,128]{1,0:T(1,128)}', space=vmem, size = 0x12000, scoped, tag = 'internal scratch']
  %s0 = inlined_call_operand.vmem [shape: f32[2,4,1], index: 0, kind: input, shape index: {}]
  %s1 = inlined_call_operand.vmem [shape: f32[2,4,256], index: 1, kind: input, shape index: {}]
  %s2 = inlined_call_operand.vmem [shape: f32[2,256], index: 2, kind: output, shape index: {}]
  %s3 = sld [smem:[#allocation0]]
  $region18: #{build_attention.1} parent=0
    _
  %s5 = ssub.s32 1, %s3
  %s6 = scalar_select 0, %s5, %s3
  // Predicated region
  $region2: #{build_attention.1} parent=0 // pred_check
    _
  $region3: #{build_attention.1} parent=0 // pred_check_branch
    %8 = sbr.rel (0) target = $region5
  $region4: #{build_attention.1} parent=0 // pred_region
    _
  $region5: #{build_attention.1} parent=0 // pred_fallthru
    _
  // Predicated region
  $region6: #{build_attention.1} parent=0 // pred_check
    _
  $region7: #{build_attention.1} parent=0 // pred_check_branch
    %10 = sbr.rel (0) target = $region9
  $region8: #{build_attention.1} parent=0 // pred_region
    _
  $region9: #{build_attention.1} parent=0 // pred_fallthru
    _
  %s11 = smul.u32 0, 2
  %s12 = smul.addr %s11, 4
  %s13 = scalar_lea.vmem %s1, %s12
  %v14 = vld [vmem:[%s13] sm:$0xff]
  %v15 = vld [vmem:[%s13 + $0x8] sm:$0xff]
  %v16 = vld [vmem:[%s0] sm:$0xf]
  %v17 = vld [vmem:[%s0 + $0x4] sm:$0xf]
  %19 = vset.pattern.permute.xlu0 0
  %20 = vperm.xlu0 %19, %v16
  %v21 = vpop.permute.xlu0 %20
  %23 = vset.pattern.permute.xlu0 0
  %24 = vperm.xlu0 %23, %v17
  %v25 = vpop.permute.xlu0 %24
  %v27 = vunpack.c.l.s4 839922192
  %v28 = vunpack.c.0.s8 %v27
  %v29 = vlaneseq
  %v30 = vshrl.u32 %v29, 7
  %v31 = vsub.s32 %v28, %v30
  %v32 = vrot.slane %v21, %v31
  %v34 = vunpack.c.l.s4 839922192
  %v35 = vunpack.c.0.s8 %v34
  %v36 = vlaneseq
  %v37 = vshrl.u32 %v36, 7
  %v38 = vsub.s32 %v35, %v37
  %v39 = vrot.slane %v25, %v38
  %v42 = vmul.f32 %v14, %v32
  %v43 = vmul.f32 %v15, %v39
  %v46 = vcombine.high %v42, %v42
  %v47 = vcombine.high %v43, %v43
  %vm50 = vcmask 1043456
  %v51 = vsel %vm50, %v42, 0.0
  %v52 = vrot.slane %v51, 4
  %v53 = vadd.f32 %v51, %v52
  %v54 = vrot.slane %v53, 2
  %v55 = vadd.f32 %v53, %v54
  %v56 = vrot.slane %v55, 1
  %v57 = vadd.f32 %v55, %v56
  %v58 = vsel %vm50, %v46, 0.0
  %v59 = vrot.slane %v58, 4
  %v60 = vadd.f32 %v58, %v59
  %v61 = vrot.slane %v60, 2
  %v62 = vadd.f32 %v60, %v61
  %v63 = vrot.slane %v62, 1
  %v64 = vadd.f32 %v62, %v63
  %v65 = vsel %vm50, %v43, 0.0
  %v66 = vrot.slane %v65, 4
  %v67 = vadd.f32 %v65, %v66
  %v68 = vrot.slane %v67, 2
  %v69 = vadd.f32 %v67, %v68
  %v70 = vrot.slane %v69, 1
  %v71 = vadd.f32 %v69, %v70
  %v72 = vsel %vm50, %v47, 0.0
  %v73 = vrot.slane %v72, 4
  %v74 = vadd.f32 %v72, %v73
  %v75 = vrot.slane %v74, 2
  %v76 = vadd.f32 %v74, %v75
  %v77 = vrot.slane %v76, 1
  %v78 = vadd.f32 %v76, %v77
  %v79 = vadd.f32 %v57, 0.0
  %v80 = vadd.f32 %v64, 0.0
  %v81 = vadd.f32 %v71, 0.0
  %v82 = vadd.f32 %v78, 0.0
  %v87 = vcombine.low %v79, %v80
  %v89 = vunpack.c.l.s4 1983009808
  %v90 = vunpack.c.0.s8 %v89
  %v91 = vlaneseq
  %v92 = vshrl.u32 %v91, 7
  %v93 = vsub.s32 %v90, %v92
  %v94 = vrot.slane %v87, %v93
  %v95 = vcombine.low %v81, %v82
  %v97 = vunpack.c.l.s4 1983009808
  %v98 = vunpack.c.0.s8 %v97
  %v99 = vlaneseq
  %v100 = vshrl.u32 %v99, 7
  %v101 = vsub.s32 %v98, %v100
  %v102 = vrot.slane %v95, %v101
  %vm103 = vcmask 1044484
  %v104 = vsel %vm103, %v94, %v94
  %vm105 = vcmask 1046534
  %v106 = vsel %vm105, %v94, %v104
  %v107 = vrot.slane %v102, 7
  %vm108 = vcmask 1041409
  %v109 = vsel %vm108, %v107, %v106
  %vm110 = vcmask 1043459
  %v111 = vsel %vm110, %v107, %v109
  %vm112 = vcmask 1045509
  %v113 = vsel %vm112, %v107, %v111
  %vm114 = vcmask 1047559
  %v115 = vsel %vm114, %v107, %v113
  %117 = vst [vmem:[%s2] sm:$0xf] %v115
  // Predicated region
  $region10: #{build_attention.1} parent=0 // pred_check
    _
  $region11: #{build_attention.1} parent=0 // pred_check_branch
    %119 = sbr.rel (0) target = $region13
  $region12: #{build_attention.1} parent=0 // pred_region
    _
  $region13: #{build_attention.1} parent=0 // pred_fallthru
    _
  // Predicated region
  $region14: #{build_attention.1} parent=0 // pred_check
    _
  $region15: #{build_attention.1} parent=0 // pred_check_branch
    %121 = sbr.rel (0) target = $region17
  $region16: #{build_attention.1} parent=0 // pred_region
    _
  $region17: #{build_attention.1} parent=0 // pred_fallthru
    _

</llo_original>
